<compile_context>
chip_gen: v7x
topology: tpu7x:2x2x1
jax: 0.10.0
libtpu: 0.0.40
codegen_flags: <defaults>
</compile_context>

<pallas_src>
import jax
import jax.numpy as jnp
from jax.experimental import pallas as pl
from jax.experimental.pallas import tpu as pltpu

# ----------------------------- module config --------------------------------
# args: n_agents=10, n_specialists=2, agent_type=0  -> self.n_agents = 8
INPUT_SHAPE   = 16     # input_shape
RNN_HIDDEN    = 32     # args.rnn_hidden_dim
LATENT_HIDDEN = 32     # args.latent_hidden_dim
LATENT_DIM    = 8      # args.latent_dim
N_ROWS        = 8      # batch(=1) * self.n_agents  (eval path requires batch==1)
N_ACTIONS     = 6      # args.n_actions
VAR_FLOOR     = 0.002  # args.var_floor
BN_EPS        = 1e-5

LANES = 128

# --------------------- parameter slab layout (rows, 128 lanes) ---------------
# Weights stored pre-transposed as (in_features, out_features), each block
# starting at an 8-aligned row, using lanes [0:out_features].
_R_W1   = 0      # (16, 32)   fc1
_R_WIH  = 16     # (32, 96)   GRU input weights  [r|z|n]
_R_WHH  = 48     # (32, 96)   GRU hidden weights [r|z|n]
_R_WE1  = 80     # (32, 32)   embed_net linear 1 (BN folded)
_R_WE2  = 112    # (32, 16)   embed_net head [mean|logvar]
_R_WL   = 144    # ( 8, 32)   latent_net linear (BN folded)
_R_WQ   = 152    # (64,  6)   stacked tail: [wqh ; wfl @ wql]
_R_BIAS = 216    # ( 8,128)   bias block, one bias vector per row (see below)
PARAM_ROWS = 224 # multiple of 8; slab = (224, 128) f32 ~= 112 KiB

# bias block row indices (within the 8-row block at _R_BIAS)
_BR_B1   = 0     # (32)
_BR_BIH  = 1     # (96)  [bir|biz|bin]
_BR_BHH  = 2     # (96)  [bhr|bhz|bhn]
_BR_BE1  = 3     # (32)  BN folded
_BR_BE2  = 4     # (16)  [mean|logvar]
_BR_BL   = 5     # (32)  BN folded
_BR_BQ   = 6     # ( 6)  folded: bfl @ wql + bq

# -------- lane layout of the packed per-step input / output slabs -----------
_L_X   = 0                       # input  lanes [ 0:16)  x_t
_L_EPS = INPUT_SHAPE             # input  lanes [16:24)  eps_t

_L_H      = 0                    # output lanes [ 0:32)  h_t
_L_MEAN   = RNN_HIDDEN           # output lanes [32:40)  mean_t
_L_VAR    = _L_MEAN + LATENT_DIM # output lanes [40:48)  var_t
_L_SAMPLE = _L_VAR + LATENT_DIM  # output lanes [48:56)  latent_sample_t
_L_Q      = _L_SAMPLE + LATENT_DIM  # output lanes [56:62) q_t
_OUT_USED = _L_Q + N_ACTIONS     # 62


# ------------------------------- kernel -------------------------------------
def _agent_kernel(xe_ref, h0_ref, p_ref, out_ref, h_state):
    f32 = jnp.float32
    H, LH, LD, A = RNN_HIDDEN, LATENT_HIDDEN, LATENT_DIM, N_ACTIONS
    t = pl.program_id(0)

    # ---- carry hidden state across timesteps in VMEM scratch ----
    @pl.when(t == 0)
    def _():
        h_state[...] = h0_ref[...]

    xe = xe_ref[0]                                    # (n, 128) lane slab
    x_in = xe[:, _L_X:_L_X + INPUT_SHAPE]             # (n, 16)
    eps = xe[:, _L_EPS:_L_EPS + LD]                   # (n, 8)
    h_prev = h_state[...]                             # (n, 32)
    n_rows = h_prev.shape[0]

    # ---- all biases: one aligned (8,128) vreg load, sliced as values ----
    biases = p_ref[_R_BIAS:_R_BIAS + 8, :]
    b1  = biases[_BR_B1:_BR_B1 + 1, 0:H]
    bih = biases[_BR_BIH:_BR_BIH + 1, 0:3 * H]
    bhh = biases[_BR_BHH:_BR_BHH + 1, 0:3 * H]
    be1 = biases[_BR_BE1:_BR_BE1 + 1, 0:LH]
    be2 = biases[_BR_BE2:_BR_BE2 + 1, 0:2 * LD]
    bl  = biases[_BR_BL:_BR_BL + 1, 0:LH]
    bq  = biases[_BR_BQ:_BR_BQ + 1, 0:A]

    # ---- x = relu(fc1(inputs)) ----
    w1 = p_ref[_R_W1:_R_W1 + INPUT_SHAPE, 0:H]
    x = jnp.maximum(jnp.dot(x_in, w1, preferred_element_type=f32) + b1, 0.0)

    # ---- GRUCell (fused: one matmul per input path, gates sliced out) ----
    wih = p_ref[_R_WIH:_R_WIH + H, 0:3 * H]
    whh = p_ref[_R_WHH:_R_WHH + H, 0:3 * H]
    gi = jnp.dot(x, wih, preferred_element_type=f32) + bih        # (n, 96)
    gh = jnp.dot(h_prev, whh, preferred_element_type=f32) + bhh   # (n, 96)
    r = jax.nn.sigmoid(gi[:, 0:H] + gh[:, 0:H])
    z = jax.nn.sigmoid(gi[:, H:2 * H] + gh[:, H:2 * H])
    ng = jnp.tanh(gi[:, 2 * H:3 * H] + r * gh[:, 2 * H:3 * H])
    h = (1.0 - z) * ng + z * h_prev
    h_state[...] = h                                  # carry to step t+1

    # ---- embed_net(h): Linear(+folded BN) -> ReLU -> fused [mean|logvar] ----
    we1 = p_ref[_R_WE1:_R_WE1 + H, 0:LH]
    e1 = jnp.maximum(jnp.dot(h, we1, preferred_element_type=f32) + be1, 0.0)
    we2 = p_ref[_R_WE2:_R_WE2 + LH, 0:2 * LD]
    mv = jnp.dot(e1, we2, preferred_element_type=f32) + be2       # (n, 16)
    mean = mv[:, 0:LD]
    var = jnp.maximum(jnp.exp(mv[:, LD:2 * LD]), VAR_FLOOR)       # clamp(exp, min=var_floor)

    # ---- gaussian_embed.rsample() ----
    sample = mean + jnp.sqrt(var) * eps

    # ---- latent_net(latent_sample): Linear(+folded BN) -> ReLU ----
    wl = p_ref[_R_WL:_R_WL + LD, 0:LH]
    l1 = jnp.maximum(jnp.dot(sample, wl, preferred_element_type=f32) + bl, 0.0)

    # ---- fc2_latent folded into fc2: one matmul on [h | l1] ----
    wq = p_ref[_R_WQ:_R_WQ + 2 * H, 0:A]              # (64, 6) = [wqh ; wfl@wql]
    hl = jnp.concatenate([h, l1], axis=-1)            # (n, 64)
    q = jnp.dot(hl, wq, preferred_element_type=f32) + bq

    # ---- single lane-dense full-width output store ----
    pad = jnp.zeros((n_rows, LANES - _OUT_USED), f32)
    out_ref[0] = jnp.concatenate([h, mean, var, sample, q, pad], axis=-1)


# ------------------------------ wrappers --------------------------------------
def hetero_latent_agent_forward_seq(inputs_seq, hidden_state, eps_seq, param_slab):
    """Run T forward steps of the module in ONE pallas_call.

    inputs_seq: (T, n, INPUT_SHAPE), hidden_state: (n, RNN_HIDDEN) initial h,
    eps_seq: (T, n, LATENT_DIM) standard-normal noise for rsample.
    Returns per-step (q, h, mean, var, sample), each with leading T axis.
    """
    T, nrows, _ = inputs_seq.shape
    h0 = hidden_state.reshape(-1, RNN_HIDDEN)

    # pack x_t and eps_t into one lane-dense per-step input slab
    xe = jnp.zeros((T, nrows, LANES), jnp.float32)
    xe = xe.at[:, :, _L_X:_L_X + INPUT_SHAPE].set(inputs_seq)
    xe = xe.at[:, :, _L_EPS:_L_EPS + LATENT_DIM].set(eps_seq)

    out = pl.pallas_call(
        _agent_kernel,
        out_shape=jax.ShapeDtypeStruct((T, nrows, LANES), jnp.float32),
        grid=(T,),
        in_specs=[
            pl.BlockSpec((1, nrows, LANES), lambda t: (t, 0, 0)),      # streamed x/eps
            pl.BlockSpec((nrows, RNN_HIDDEN), lambda t: (0, 0)),       # h0 (resident)
            pl.BlockSpec((PARAM_ROWS, LANES), lambda t: (0, 0)),       # params (resident)
        ],
        out_specs=pl.BlockSpec((1, nrows, LANES), lambda t: (t, 0, 0)),
        scratch_shapes=[pltpu.VMEM((nrows, RNN_HIDDEN), jnp.float32)],  # carried h
        compiler_params=pltpu.CompilerParams(dimension_semantics=("arbitrary",)),
    )(xe, h0, param_slab)

    h_seq  = out[:, :, _L_H:_L_H + RNN_HIDDEN]
    mean   = out[:, :, _L_MEAN:_L_MEAN + LATENT_DIM]
    var    = out[:, :, _L_VAR:_L_VAR + LATENT_DIM]
    sample = out[:, :, _L_SAMPLE:_L_SAMPLE + LATENT_DIM]
    q      = out[:, :, _L_Q:_L_Q + N_ACTIONS]
    return q, h_seq, mean, var, sample


def hetero_latent_agent_forward(inputs, hidden_state, eps, param_slab):
    """Single-step forward matching the original module call signature."""
    q, h, mean, var, sample = hetero_latent_agent_forward_seq(
        inputs[None], hidden_state, eps[None], param_slab)
    return q[0], h[0], mean[0], var[0], sample[0]


# --------------------------- parameter init -----------------------------------
def _linear(key, fan_in, fan_out):
    """PyTorch nn.Linear default init, weight returned transposed (in, out)."""
    kw, kb = jax.random.split(key)
    bound = 1.0 / (fan_in ** 0.5)
    w = jax.random.uniform(kw, (fan_in, fan_out), jnp.float32, -bound, bound)
    b = jax.random.uniform(kb, (1, fan_out), jnp.float32, -bound, bound)
    return w, b


def init_params(key):
    keys = jax.random.split(key, 32)
    ki = iter(keys)

    # fc1
    w1, b1 = _linear(next(ki), INPUT_SHAPE, RNN_HIDDEN)

    # GRUCell: weight_ih/(hh) are (3H, H) in PyTorch, gate order [r, z, n];
    # generate each gate block already transposed with bound 1/sqrt(H).
    gbound = 1.0 / (RNN_HIDDEN ** 0.5)
    def gru_mat(k):
        return jax.random.uniform(k, (RNN_HIDDEN, RNN_HIDDEN), jnp.float32, -gbound, gbound)
    def gru_vec(k):
        return jax.random.uniform(k, (1, RNN_HIDDEN), jnp.float32, -gbound, gbound)
    wir, wiz, win = gru_mat(next(ki)), gru_mat(next(ki)), gru_mat(next(ki))
    whr, whz, whn = gru_mat(next(ki)), gru_mat(next(ki)), gru_mat(next(ki))
    bir, biz, bin_ = gru_vec(next(ki)), gru_vec(next(ki)), gru_vec(next(ki))
    bhr, bhz, bhn = gru_vec(next(ki)), gru_vec(next(ki)), gru_vec(next(ki))

    # embed_net: Linear(H, LH) -> BN(LH) -> ReLU -> Linear(LH, 2*LD)
    we1, be1 = _linear(next(ki), RNN_HIDDEN, LATENT_HIDDEN)
    we2, be2 = _linear(next(ki), LATENT_HIDDEN, 2 * LATENT_DIM)
    we2m, we2v = we2[:, :LATENT_DIM], we2[:, LATENT_DIM:]
    be2m, be2v = be2[:, :LATENT_DIM], be2[:, LATENT_DIM:]

    # latent_net: Linear(LD, LH) -> BN(LH) -> ReLU
    wl, bl = _linear(next(ki), LATENT_DIM, LATENT_HIDDEN)

    # fc2_latent: Linear(LH, H)
    wfl, bfl = _linear(next(ki), LATENT_HIDDEN, RNN_HIDDEN)

    # fc2: Linear(2H, A); split concatenated input weight into h / latent parts.
    wq, bq = _linear(next(ki), 2 * RNN_HIDDEN, N_ACTIONS)
    wqh, wql = wq[:RNN_HIDDEN, :], wq[RNN_HIDDEN:, :]

    # BatchNorm1d (fresh module, eval mode): gamma=1, beta=0, rm=0, rv=1
    gamma = jnp.ones((1, LATENT_HIDDEN), jnp.float32)
    beta = jnp.zeros((1, LATENT_HIDDEN), jnp.float32)
    rm = jnp.zeros((1, LATENT_HIDDEN), jnp.float32)
    rv = jnp.ones((1, LATENT_HIDDEN), jnp.float32)
    scale = gamma / jnp.sqrt(rv + BN_EPS)
    shift = beta - rm * scale
    bn1s, bn1b = scale, shift
    bn2s, bn2b = scale, shift

    return [
        w1, b1,
        wir, wiz, win, whr, whz, whn,
        bir, biz, bin_, bhr, bhz, bhn,
        we1, be1, bn1s, bn1b,
        we2m, be2m, we2v, be2v,
        wl, bl, bn2s, bn2b,
        wfl, bfl,
        wqh, wql, bq,
    ]


# --------------------------- parameter packing --------------------------------
def pack_params(raw):
    """Fuse GRU / head weights, fold eval-mode BN and fc2_latent->fc2, and pack
    everything into one lane-padded (PARAM_ROWS, 128) f32 slab (done once)."""
    (w1, b1, wir, wiz, win, whr, whz, whn,
     bir, biz, bin_, bhr, bhz, bhn,
     we1, be1, bn1s, bn1b, we2m, be2m, we2v, be2v,
     wl, bl, bn2s, bn2b, wfl, bfl, wqh, wql, bq) = raw

    # GRU fusion (gate order [r, z, n], matching PyTorch GRUCell)
    wih = jnp.concatenate([wir, wiz, win], axis=1)    # (32, 96)
    whh = jnp.concatenate([whr, whz, whn], axis=1)    # (32, 96)
    bih = jnp.concatenate([bir, biz, bin_], axis=1)   # (1, 96)
    bhh = jnp.concatenate([bhr, bhz, bhn], axis=1)    # (1, 96)

    # Fold eval-mode BatchNorm into the preceding Linear
    we1f = we1 * bn1s
    be1f = be1 * bn1s + bn1b
    wlf = wl * bn2s
    blf = bl * bn2s + bn2b

    # Fuse mean|logvar head
    we2 = jnp.concatenate([we2m, we2v], axis=1)       # (32, 16)
    be2 = jnp.concatenate([be2m, be2v], axis=1)       # (1, 16)

    # Fold fc2_latent into fc2 and stack the tail matmul:
    #   q = h @ wqh + (l1 @ wfl + bfl) @ wql + bq
    #     = [h | l1] @ [wqh ; wfl @ wql] + (bfl @ wql + bq)
    wcomb = wfl @ wql                                  # (32, 6)
    wq_stacked = jnp.concatenate([wqh, wcomb], axis=0) # (64, 6)
    bq_comb = bfl @ wql + bq                           # (1, 6)

    slab = jnp.zeros((PARAM_ROWS, LANES), jnp.float32)

    def put(s, row, arr):
        return s.at[row:row + arr.shape[0], 0:arr.shape[1]].set(arr)

    slab = put(slab, _R_W1,  w1)
    slab = put(slab, _R_WIH, wih)
    slab = put(slab, _R_WHH, whh)
    slab = put(slab, _R_WE1, we1f)
    slab = put(slab, _R_WE2, we2)
    slab = put(slab, _R_WL,  wlf)
    slab = put(slab, _R_WQ,  wq_stacked)

    slab = put(slab, _R_BIAS + _BR_B1,  b1)
    slab = put(slab, _R_BIAS + _BR_BIH, bih)
    slab = put(slab, _R_BIAS + _BR_BHH, bhh)
    slab = put(slab, _R_BIAS + _BR_BE1, be1f)
    slab = put(slab, _R_BIAS + _BR_BE2, be2)
    slab = put(slab, _R_BIAS + _BR_BL,  blf)
    slab = put(slab, _R_BIAS + _BR_BQ,  bq_comb)
    return slab


# --------------------------- pure-JAX reference -------------------------------
def _reference_step(inputs, h_in, eps, p):
    """Unfolded, unfused single-step reference (matches PyTorch module math)."""
    (w1, b1, wir, wiz, win, whr, whz, whn,
     bir, biz, bin_, bhr, bhz, bhn,
     we1, be1, bn1s, bn1b, we2m, be2m, we2v, be2v,
     wl, bl, bn2s, bn2b, wfl, bfl, wqh, wql, bq) = p
    x = jax.nn.relu(inputs @ w1 + b1)
    r = jax.nn.sigmoid(x @ wir + bir + h_in @ whr + bhr)
    z = jax.nn.sigmoid(x @ wiz + biz + h_in @ whz + bhz)
    ng = jnp.tanh(x @ win + bin_ + r * (h_in @ whn + bhn))
    h = (1 - z) * ng + z * h_in
    e1 = jax.nn.relu((h @ we1 + be1) * bn1s + bn1b)
    mean = e1 @ we2m + be2m
    var = jnp.maximum(jnp.exp(e1 @ we2v + be2v), VAR_FLOOR)
    sample = mean + jnp.sqrt(var) * eps
    l1 = jax.nn.relu((sample @ wl + bl) * bn2s + bn2b)
    fcl = l1 @ wfl + bfl
    q = h @ wqh + fcl @ wql + bq
    return q, h, mean, var, sample


# --------------------------------- main ---------------------------------------
if __name__ == "__main__":
    key = jax.random.PRNGKey(0)
    k_in, k_h, k_eps, k_p = jax.random.split(key, 4)

    T = 8  # number of RNN timesteps processed in one kernel call
    inputs_seq = jax.random.normal(k_in, (T, N_ROWS, INPUT_SHAPE), jnp.float32)
    hidden0 = jax.random.normal(k_h, (N_ROWS, RNN_HIDDEN), jnp.float32)
    eps_seq = jax.random.normal(k_eps, (T, N_ROWS, LATENT_DIM), jnp.float32)

    raw_params = init_params(k_p)
    param_slab = pack_params(raw_params)        # one-time packing / folding

    outs = hetero_latent_agent_forward_seq(inputs_seq, hidden0, eps_seq, param_slab)
    outs = jax.block_until_ready(outs)

    # sequential pure-JAX reference over the same T steps
    h = hidden0
    refs = {"q": [], "h": [], "mean": [], "var": [], "sample": []}
    for t in range(T):
        q_r, h, m_r, v_r, s_r = _reference_step(inputs_seq[t], h, eps_seq[t], raw_params)
        refs["q"].append(q_r); refs["h"].append(h); refs["mean"].append(m_r)
        refs["var"].append(v_r); refs["sample"].append(s_r)
    ref_stack = [jnp.stack(refs[k]) for k in ("q", "h", "mean", "var", "sample")]

    names = ["q", "h", "mean", "var", "sample"]
    for name, o, r in zip(names, outs, ref_stack):
        assert o.shape == r.shape and o.dtype == r.dtype, name
        assert jnp.allclose(o, r, atol=1e-4, rtol=1e-4), f"mismatch vs reference: {name}"

    # single-step wrapper sanity check (matches module's per-call signature)
    q1, h1, m1, v1, s1 = hetero_latent_agent_forward(
        inputs_seq[0], hidden0, eps_seq[0], param_slab)
    q1 = jax.block_until_ready(q1)
    assert jnp.allclose(q1, ref_stack[0][0], atol=1e-4, rtol=1e-4), "single-step q mismatch"

    print("KERNEL_OK")
</pallas_src>

<mosaic_0001>
module attributes {stable_mosaic.version = 11 : i64} {
  func.func @_agent_kernel(%arg0: i32, %arg1: memref<1x8x128xf32, #tpu.memory_space<vmem>>, %arg2: memref<8x32xf32, #tpu.memory_space<vmem>>, %arg3: memref<224x128xf32, #tpu.memory_space<vmem>>, %arg4: memref<1x8x128xf32, #tpu.memory_space<vmem>>, %arg5: memref<8x32xf32, #tpu.memory_space<vmem>>) attributes {dimension_semantics = [#tpu.dimension_semantics<arbitrary>], iteration_bounds = array<i64: 8>, scalar_prefetch = 0 : i64, scratch_operands = 1 : i64, tpu.core_type = #tpu.core_type<tc>, window_params = [{transform_indices = @transform_0, window_bounds = array<i64: 1, 8, 128>}, {pipeline_mode = #tpu.pipeline_mode<synchronous>, transform_indices = @transform_1, window_bounds = array<i64: 8, 32>}, {pipeline_mode = #tpu.pipeline_mode<synchronous>, transform_indices = @transform_2, window_bounds = array<i64: 224, 128>}, {transform_indices = @transform_3, window_bounds = array<i64: 1, 8, 128>}]} {
    %c0_i32 = arith.constant 0 : i32
    %0 = arith.cmpi eq, %arg0, %c0_i32 : i32
    %1 = arith.extui %0 : i1 to i32
    %c0_i32_0 = arith.constant 0 : i32
    %2 = arith.cmpi ne, %1, %c0_i32_0 : i32
    scf.if %2 {
      %c0_33 = arith.constant 0 : index
      %c0_34 = arith.constant 0 : index
      %91 = vector.load %arg2[%c0_33, %c0_34] : memref<8x32xf32, #tpu.memory_space<vmem>>, vector<8x32xf32>
      %c0_35 = arith.constant 0 : index
      %c0_36 = arith.constant 0 : index
      %92 = vector.load %arg5[%c0_35, %c0_36] : memref<8x32xf32, #tpu.memory_space<vmem>>, vector<8x32xf32>
      tpu.vector_store %arg5[%c0_35, %c0_36], %91 {strides = array<i32>} : memref<8x32xf32, #tpu.memory_space<vmem>>, vector<8x32xf32>,
    } else {
    }
    %c0 = arith.constant 0 : index
    %c0_1 = arith.constant 0 : index
    %c0_2 = arith.constant 0 : index
    %3 = vector.load %arg1[%c0, %c0_1, %c0_2] : memref<1x8x128xf32, #tpu.memory_space<vmem>>, vector<1x8x128xf32>
    %4 = vector.shape_cast %3 : vector<1x8x128xf32> to vector<8x128xf32>
    %5 = vector.extract_strided_slice %4 {offsets = [0, 0], sizes = [8, 16], strides = [1, 1]} : vector<8x128xf32> to vector<8x16xf32>
    %6 = vector.extract_strided_slice %4 {offsets = [0, 16], sizes = [8, 8], strides = [1, 1]} : vector<8x128xf32> to vector<8x8xf32>
    %c0_3 = arith.constant 0 : index
    %c0_4 = arith.constant 0 : index
    %7 = vector.load %arg5[%c0_3, %c0_4] : memref<8x32xf32, #tpu.memory_space<vmem>>, vector<8x32xf32>
    %c216 = arith.constant 216 : index
    %c0_5 = arith.constant 0 : index
    %8 = vector.load %arg3[%c216, %c0_5] : memref<224x128xf32, #tpu.memory_space<vmem>>, vector<8x128xf32>
    %9 = vector.extract_strided_slice %8 {offsets = [0, 0], sizes = [1, 32], strides = [1, 1]} : vector<8x128xf32> to vector<1x32xf32>
    %10 = vector.extract_strided_slice %8 {offsets = [1, 0], sizes = [1, 96], strides = [1, 1]} : vector<8x128xf32> to vector<1x96xf32>
    %11 = vector.extract_strided_slice %8 {offsets = [2, 0], sizes = [1, 96], strides = [1, 1]} : vector<8x128xf32> to vector<1x96xf32>
    %12 = vector.extract_strided_slice %8 {offsets = [3, 0], sizes = [1, 32], strides = [1, 1]} : vector<8x128xf32> to vector<1x32xf32>
    %13 = vector.extract_strided_slice %8 {offsets = [4, 0], sizes = [1, 16], strides = [1, 1]} : vector<8x128xf32> to vector<1x16xf32>
    %14 = vector.extract_strided_slice %8 {offsets = [5, 0], sizes = [1, 32], strides = [1, 1]} : vector<8x128xf32> to vector<1x32xf32>
    %15 = vector.extract_strided_slice %8 {offsets = [6, 0], sizes = [1, 6], strides = [1, 1]} : vector<8x128xf32> to vector<1x6xf32>
    %c0_6 = arith.constant 0 : index
    %c0_7 = arith.constant 0 : index
    %16 = vector.load %arg3[%c0_6, %c0_7] : memref<224x128xf32, #tpu.memory_space<vmem>>, vector<16x32xf32>
    %cst = arith.constant dense<0.000000e+00> : vector<8x32xf32>
    %17 = tpu.matmul %5, %16, %cst {dimension_numbers = #tpu.dot_dimension_numbers<[1], [0], [0], [1], [0, 0, 1, 1], [], []>} : vector<8x16xf32>, vector<16x32xf32>, vector<8x32xf32> -> vector<8x32xf32>
    %18 = vector.broadcast %9 : vector<1x32xf32> to vector<8x32xf32>
    %19 = arith.addf %17, %18 : vector<8x32xf32>
    %cst_8 = arith.constant 0.000000e+00 : f32
    %20 = vector.broadcast %cst_8 : f32 to vector<8x32xf32>
    %21 = arith.maximumf %19, %20 : vector<8x32xf32>
    %c16 = arith.constant 16 : index
    %c0_9 = arith.constant 0 : index
    %22 = vector.load %arg3[%c16, %c0_9] : memref<224x128xf32, #tpu.memory_space<vmem>>, vector<32x96xf32>
    %c48 = arith.constant 48 : index
    %c0_10 = arith.constant 0 : index
    %23 = vector.load %arg3[%c48, %c0_10] : memref<224x128xf32, #tpu.memory_space<vmem>>, vector<32x96xf32>
    %cst_11 = arith.constant dense<0.000000e+00> : vector<8x96xf32>
    %24 = tpu.matmul %21, %22, %cst_11 {dimension_numbers = #tpu.dot_dimension_numbers<[1], [0], [0], [1], [0, 0, 1, 1], [], []>} : vector<8x32xf32>, vector<32x96xf32>, vector<8x96xf32> -> vector<8x96xf32>
    %25 = vector.broadcast %10 : vector<1x96xf32> to vector<8x96xf32>
    %26 = arith.addf %24, %25 : vector<8x96xf32>
    %cst_12 = arith.constant dense<0.000000e+00> : vector<8x96xf32>
    %27 = tpu.matmul %7, %23, %cst_12 {dimension_numbers = #tpu.dot_dimension_numbers<[1], [0], [0], [1], [0, 0, 1, 1], [], []>} : vector<8x32xf32>, vector<32x96xf32>, vector<8x96xf32> -> vector<8x96xf32>
    %28 = vector.broadcast %11 : vector<1x96xf32> to vector<8x96xf32>
    %29 = arith.addf %27, %28 : vector<8x96xf32>
    %30 = vector.extract_strided_slice %26 {offsets = [0, 0], sizes = [8, 32], strides = [1, 1]} : vector<8x96xf32> to vector<8x32xf32>
    %31 = vector.extract_strided_slice %29 {offsets = [0, 0], sizes = [8, 32], strides = [1, 1]} : vector<8x96xf32> to vector<8x32xf32>
    %32 = arith.addf %30, %31 : vector<8x32xf32>
    %33 = arith.negf %32 : vector<8x32xf32>
    %34 = math.exp %33 : vector<8x32xf32>
    %cst_13 = arith.constant 1.000000e+00 : f32
    %35 = vector.broadcast %cst_13 : f32 to vector<8x32xf32>
    %36 = arith.addf %35, %34 : vector<8x32xf32>
    %37 = arith.divf %35, %36 : vector<8x32xf32>
    %38 = vector.extract_strided_slice %26 {offsets = [0, 32], sizes = [8, 32], strides = [1, 1]} : vector<8x96xf32> to vector<8x32xf32>
    %39 = vector.extract_strided_slice %29 {offsets = [0, 32], sizes = [8, 32], strides = [1, 1]} : vector<8x96xf32> to vector<8x32xf32>
    %40 = arith.addf %38, %39 : vector<8x32xf32>
    %41 = arith.negf %40 : vector<8x32xf32>
    %42 = math.exp %41 : vector<8x32xf32>
    %cst_14 = arith.constant 1.000000e+00 : f32
    %43 = vector.broadcast %cst_14 : f32 to vector<8x32xf32>
    %44 = arith.addf %43, %42 : vector<8x32xf32>
    %45 = arith.divf %43, %44 : vector<8x32xf32>
    %46 = vector.extract_strided_slice %26 {offsets = [0, 64], sizes = [8, 32], strides = [1, 1]} : vector<8x96xf32> to vector<8x32xf32>
    %47 = vector.extract_strided_slice %29 {offsets = [0, 64], sizes = [8, 32], strides = [1, 1]} : vector<8x96xf32> to vector<8x32xf32>
    %48 = arith.mulf %37, %47 : vector<8x32xf32>
    %49 = arith.addf %46, %48 : vector<8x32xf32>
    %50 = math.tanh %49 : vector<8x32xf32>
    %cst_15 = arith.constant 1.000000e+00 : f32
    %51 = vector.broadcast %cst_15 : f32 to vector<8x32xf32>
    %52 = arith.subf %51, %45 : vector<8x32xf32>
    %53 = arith.mulf %52, %50 : vector<8x32xf32>
    %54 = arith.mulf %45, %7 : vector<8x32xf32>
    %55 = arith.addf %53, %54 : vector<8x32xf32>
    %c0_16 = arith.constant 0 : index
    %c0_17 = arith.constant 0 : index
    %56 = vector.load %arg5[%c0_16, %c0_17] : memref<8x32xf32, #tpu.memory_space<vmem>>, vector<8x32xf32>
    tpu.vector_store %arg5[%c0_16, %c0_17], %55 {strides = array<i32>} : memref<8x32xf32, #tpu.memory_space<vmem>>, vector<8x32xf32>,
    %c80 = arith.constant 80 : index
    %c0_18 = arith.constant 0 : index
    %57 = vector.load %arg3[%c80, %c0_18] : memref<224x128xf32, #tpu.memory_space<vmem>>, vector<32x32xf32>
    %cst_19 = arith.constant dense<0.000000e+00> : vector<8x32xf32>
    %58 = tpu.matmul %55, %57, %cst_19 {dimension_numbers = #tpu.dot_dimension_numbers<[1], [0], [0], [1], [0, 0, 1, 1], [], []>} : vector<8x32xf32>, vector<32x32xf32>, vector<8x32xf32> -> vector<8x32xf32>
    %59 = vector.broadcast %12 : vector<1x32xf32> to vector<8x32xf32>
    %60 = arith.addf %58, %59 : vector<8x32xf32>
    %cst_20 = arith.constant 0.000000e+00 : f32
    %61 = vector.broadcast %cst_20 : f32 to vector<8x32xf32>
    %62 = arith.maximumf %60, %61 : vector<8x32xf32>
    %c112 = arith.constant 112 : index
    %c0_21 = arith.constant 0 : index
    %63 = vector.load %arg3[%c112, %c0_21] : memref<224x128xf32, #tpu.memory_space<vmem>>, vector<32x16xf32>
    %cst_22 = arith.constant dense<0.000000e+00> : vector<8x16xf32>
    %64 = tpu.matmul %62, %63, %cst_22 {dimension_numbers = #tpu.dot_dimension_numbers<[1], [0], [0], [1], [0, 0, 1, 1], [], []>} : vector<8x32xf32>, vector<32x16xf32>, vector<8x16xf32> -> vector<8x16xf32>
    %65 = vector.broadcast %13 : vector<1x16xf32> to vector<8x16xf32>
    %66 = arith.addf %64, %65 : vector<8x16xf32>
    %67 = vector.extract_strided_slice %66 {offsets = [0, 0], sizes = [8, 8], strides = [1, 1]} : vector<8x16xf32> to vector<8x8xf32>
    %68 = vector.extract_strided_slice %66 {offsets = [0, 8], sizes = [8, 8], strides = [1, 1]} : vector<8x16xf32> to vector<8x8xf32>
    %69 = math.exp %68 : vector<8x8xf32>
    %cst_23 = arith.constant 2.000000e-03 : f32
    %70 = vector.broadcast %cst_23 : f32 to vector<8x8xf32>
    %71 = arith.maximumf %69, %70 : vector<8x8xf32>
    %72 = math.sqrt %71 : vector<8x8xf32>
    %73 = arith.mulf %72, %6 : vector<8x8xf32>
    %74 = arith.addf %67, %73 : vector<8x8xf32>
    %c144 = arith.constant 144 : index
    %c0_24 = arith.constant 0 : index
    %75 = vector.load %arg3[%c144, %c0_24] : memref<224x128xf32, #tpu.memory_space<vmem>>, vector<8x32xf32>
    %cst_25 = arith.constant dense<0.000000e+00> : vector<8x32xf32>
    %76 = tpu.matmul %74, %75, %cst_25 {dimension_numbers = #tpu.dot_dimension_numbers<[1], [0], [0], [1], [0, 0, 1, 1], [], []>} : vector<8x8xf32>, vector<8x32xf32>, vector<8x32xf32> -> vector<8x32xf32>
    %77 = vector.broadcast %14 : vector<1x32xf32> to vector<8x32xf32>
    %78 = arith.addf %76, %77 : vector<8x32xf32>
    %cst_26 = arith.constant 0.000000e+00 : f32
    %79 = vector.broadcast %cst_26 : f32 to vector<8x32xf32>
    %80 = arith.maximumf %78, %79 : vector<8x32xf32>
    %c152 = arith.constant 152 : index
    %c0_27 = arith.constant 0 : index
    %81 = vector.load %arg3[%c152, %c0_27] : memref<224x128xf32, #tpu.memory_space<vmem>>, vector<64x6xf32>
    %82 = tpu.concatenate %55, %80 in 1 : vector<8x32xf32>, vector<8x32xf32> -> vector<8x64xf32>
    %cst_28 = arith.constant dense<0.000000e+00> : vector<8x6xf32>
    %83 = tpu.matmul %82, %81, %cst_28 {dimension_numbers = #tpu.dot_dimension_numbers<[1], [0], [0], [1], [0, 0, 1, 1], [], []>} : vector<8x64xf32>, vector<64x6xf32>, vector<8x6xf32> -> vector<8x6xf32>
    %84 = vector.broadcast %15 : vector<1x6xf32> to vector<8x6xf32>
    %85 = arith.addf %83, %84 : vector<8x6xf32>
    %cst_29 = arith.constant 0.000000e+00 : f32
    %86 = vector.broadcast %cst_29 : f32 to vector<8x66xf32>
    %87 = tpu.concatenate %55, %67, %71, %74, %85, %86 in 1 : vector<8x32xf32>, vector<8x8xf32>, vector<8x8xf32>, vector<8x8xf32>, vector<8x6xf32>, vector<8x66xf32> -> vector<8x128xf32>
    %c0_30 = arith.constant 0 : index
    %c0_31 = arith.constant 0 : index
    %c0_32 = arith.constant 0 : index
    %88 = vector.load %arg4[%c0_30, %c0_31, %c0_32] : memref<1x8x128xf32, #tpu.memory_space<vmem>>, vector<1x8x128xf32>
    %89 = vector.shape_cast %88 : vector<1x8x128xf32> to vector<8x128xf32>
    %90 = vector.shape_cast %87 : vector<8x128xf32> to vector<1x8x128xf32>
    tpu.vector_store %arg4[%c0_30, %c0_31, %c0_32], %90 {strides = array<i32>} : memref<1x8x128xf32, #tpu.memory_space<vmem>>, vector<1x8x128xf32>,
    return
  }
  func.func @transform_0(%arg0: i32) -> (i32, i32, i32) {
    %c0_i32 = arith.constant 0 : i32
    %c0_i32_0 = arith.constant 0 : i32
    %c0_i32_1 = arith.constant 0 : i32
    return %arg0, %c0_i32, %c0_i32_0 : i32, i32, i32
  }
  func.func @transform_1(%arg0: i32) -> (i32, i32) {
    %c0_i32 = arith.constant 0 : i32
    %c0_i32_0 = arith.constant 0 : i32
    %c0_i32_1 = arith.constant 0 : i32
    return %c0_i32, %c0_i32_0 : i32, i32
  }
  func.func @transform_2(%arg0: i32) -> (i32, i32) {
    %c0_i32 = arith.constant 0 : i32
    %c0_i32_0 = arith.constant 0 : i32
    %c0_i32_1 = arith.constant 0 : i32
    return %c0_i32, %c0_i32_0 : i32, i32
  }
  func.func @transform_3(%arg0: i32) -> (i32, i32, i32) {
    %c0_i32 = arith.constant 0 : i32
    %c0_i32_0 = arith.constant 0 : i32
    %c0_i32_1 = arith.constant 0 : i32
    return %arg0, %c0_i32, %c0_i32_0 : i32, i32, i32
  }
}

</mosaic_0001>

<llo_original>
// kernel: tpu_custom_call.1
$region0: #{tpu_custom_call.1}
  #allocation0 [shape = 'u32[]', space=smem, size = 0x4, offset = 0x4, fixed_abs, tag = 'smem constant byte address 0x4 - core index']
  #allocation1 [shape = 'u32[144,128]{1,0:T(1,128)}', space=vmem, size = 0x12000, scoped, tag = 'internal scratch']
  #allocation2 [shape = 'f32[8,32]{1,0:T(8,128)}', space=vmem, size = 0x1000, scoped, tag = 'scratch operand']
  %s0 = inlined_call_operand.hbm [shape: f32[8,8,128], index: 0, kind: input, shape index: {}]
  %s1 = inlined_call_operand.hbm [shape: f32[8,32], index: 1, kind: input, shape index: {}]
  %s2 = inlined_call_operand.hbm [shape: f32[224,128], index: 2, kind: input, shape index: {}]
  %s3 = inlined_call_operand.hbm [shape: f32[8,8,128], index: 3, kind: output, shape index: {}]
  %s4 = sld [smem:[#allocation0]]
  $region61: #{tpu_custom_call.1} parent=0
    _
  %s6 = ssub.s32 1, %s4
  %s7 = scalar_select 0, %s6, %s4
  $region1: #{tpu_custom_call.1} parent=0
    #allocation3 [shape = 'u8[8192]{0}', space=vmem, size = 0x2000, scoped, tag = 'input window, operand 0']
    #allocation4 [shape = 's32[2]{0}', space=sflag, size = 0x8, scoped, tag = 'scoped memory for tpu_custom_call.1']
    #allocation5 [shape = 's32[2]{0}', space=sflag, size = 0x8, scoped, tag = 'scoped memory for tpu_custom_call.1']
    #allocation6 [shape = 'u8[4096]{0}', space=vmem, size = 0x1000, scoped, tag = 'input window, operand 1, single buffered']
    #allocation7 [shape = 's32[1]{0}', space=sflag, size = 0x4, scoped, tag = 'scoped memory for tpu_custom_call.1']
    #allocation8 [shape = 'u8[114688]{0}', space=vmem, size = 0x1c000, scoped, tag = 'input window, operand 2, single buffered']
    #allocation9 [shape = 'u8[8192]{0}', space=vmem, size = 0x2000, scoped, tag = 'output window, operand 0']
    %8 = vsyncpa [#allocation4], 0
    %s9 = scalar_lea.sflag [#allocation4], 1
    %10 = vsyncpa %s9, 0
    %11 = vsyncpa [#allocation7], 0
    %12 = vsyncpa [#allocation5], 0
    %s13 = scalar_lea.sflag [#allocation5], 1
    %14 = vsyncpa %s13, 0
    loop: start=0, step=1, limit=10
    $region2: #{tpu_custom_call.1} parent=1 // loop_pre_header
      _
    $region3: #{tpu_custom_call.1} parent=1 // loop_header
      %s16 = sphi 0, %s20
      %p17 = scmp.ge.s32.totalorder %s16, 10
      %s26 = sphi 0, %s28
      %s29 = sphi 0, %s26
      %s30 = sphi 0, %s29
      %s46 = sphi 0, %s30
      %s50 = sphi 0, %s50
      %s52 = sphi 0, %s50
      %s53 = sphi 0, %s52
      %s67 = sphi 0, %s53
      %s71 = sphi 0, %s71
      %s73 = sphi 0, %s71
      %s74 = sphi 0, %s73
      %s88 = sphi 0, %s74
      %s94 = sphi 0, %s96
      %s97 = sphi 0, %s94
      %s98 = sphi 0, %s97
      %s114 = sphi 0, %s98
    $region4: #{tpu_custom_call.1} parent=1 // loop_header_branch
      %19 = sbr.rel (%p17) target = $region8
    $region5: #{tpu_custom_call.1} parent=1 // loop_body
      %s21 = ssub.s32 %s16, 1
      %s22 = ssub.s32 %s16, 2
      %s23 = sadd.s32 %s16, 1
      %s24 = ssub.s32 %s16, %s23
      %p25 = scmp.eq.s32.totalorder %s24, 0
      %s27 = sadd.s32 %s26, 1
      %s28 = scalar_select %p25, %s26, %s27
      %p31 = pneg %p25
      %p32 = scmp.eq.s32.totalorder %s16, 7
      %p33 = por %p31, %p32
      %p34 = scmp.ne.s32.totalorder %s26, %s29
      %p35 = scmp.eq.s32.totalorder %s16, 0
      %p36 = por %p34, %p35
      %p37 = scmp.ne.s32.totalorder %s26, %s29
      %p38 = scmp.eq.s32.totalorder %s21, 7
      %p39 = por %p37, %p38
      %p40 = scmp.ne.s32.totalorder %s29, %s30
      %p41 = scmp.eq.s32.totalorder %s21, 0
      %p42 = por %p40, %p41
      %p43 = scmp.ne.s32.totalorder %s29, %s30
      %p44 = scmp.eq.s32.totalorder %s22, 7
      %p45 = por %p43, %p44
      %p47 = scmp.ne.s32.totalorder %s30, %s46
      %p48 = scmp.eq.s32.totalorder %s22, 0
      %p49 = por %p47, %p48
      %s51 = sadd.s32 %s50, 1
      %p54 = scmp.eq.s32.totalorder %s16, 7
      %p55 = scmp.ne.s32.totalorder %s50, %s52
      %p56 = scmp.eq.s32.totalorder %s16, 0
      %p57 = por %p55, %p56
      %p58 = scmp.ne.s32.totalorder %s50, %s52
      %p59 = scmp.eq.s32.totalorder %s21, 7
      %p60 = por %p58, %p59
      %p61 = scmp.ne.s32.totalorder %s52, %s53
      %p62 = scmp.eq.s32.totalorder %s21, 0
      %p63 = por %p61, %p62
      %p64 = scmp.ne.s32.totalorder %s52, %s53
      %p65 = scmp.eq.s32.totalorder %s22, 7
      %p66 = por %p64, %p65
      %p68 = scmp.ne.s32.totalorder %s53, %s67
      %p69 = scmp.eq.s32.totalorder %s22, 0
      %p70 = por %p68, %p69
      %s72 = sadd.s32 %s71, 1
      %p75 = scmp.eq.s32.totalorder %s16, 7
      %p76 = scmp.ne.s32.totalorder %s71, %s73
      %p77 = scmp.eq.s32.totalorder %s16, 0
      %p78 = por %p76, %p77
      %p79 = scmp.ne.s32.totalorder %s71, %s73
      %p80 = scmp.eq.s32.totalorder %s21, 7
      %p81 = por %p79, %p80
      %p82 = scmp.ne.s32.totalorder %s73, %s74
      %p83 = scmp.eq.s32.totalorder %s21, 0
      %p84 = por %p82, %p83
      %p85 = scmp.ne.s32.totalorder %s73, %s74
      %p86 = scmp.eq.s32.totalorder %s22, 7
      %p87 = por %p85, %p86
      %p89 = scmp.ne.s32.totalorder %s74, %s88
      %p90 = scmp.eq.s32.totalorder %s22, 0
      %p91 = por %p89, %p90
      %s92 = ssub.s32 %s16, %s23
      %p93 = scmp.eq.s32.totalorder %s92, 0
      %s95 = sadd.s32 %s94, 1
      %s96 = scalar_select %p93, %s94, %s95
      %p99 = pneg %p93
      %p100 = scmp.eq.s32.totalorder %s16, 7
      %p101 = por %p99, %p100
      %p102 = scmp.ne.s32.totalorder %s94, %s97
      %p103 = scmp.eq.s32.totalorder %s16, 0
      %p104 = por %p102, %p103
      %p105 = scmp.ne.s32.totalorder %s94, %s97
      %p106 = scmp.eq.s32.totalorder %s21, 7
      %p107 = por %p105, %p106
      %p108 = scmp.ne.s32.totalorder %s97, %s98
      %p109 = scmp.eq.s32.totalorder %s21, 0
      %p110 = por %p108, %p109
      %p111 = scmp.ne.s32.totalorder %s97, %s98
      %p112 = scmp.eq.s32.totalorder %s22, 7
      %p113 = por %p111, %p112
      %p115 = scmp.ne.s32.totalorder %s98, %s114
      %p116 = scmp.eq.s32.totalorder %s22, 0
      %p117 = por %p115, %p116
      %p118 = scmp.le.s32.totalorder 1, %s16
      %p119 = scmp.lt.s32.totalorder %s16, 9
      %p120 = pnand %p118, %p119
      %p121 = pneg %p120
      // Predicated region
      $region9: #{tpu_custom_call.1} parent=5 // pred_check
        _
      $region10: #{tpu_custom_call.1} parent=5 // pred_check_branch
        %123 = sbr.rel (%p120) target = $region12
      $region11: #{tpu_custom_call.1} parent=5 // pred_region
        %s124 = ssub.s32 %s16, 1
        // Predicated region
        $region13: #{tpu_custom_call.1} parent=11 // pred_check
          %p125 = pneg %p63
        $region14: #{tpu_custom_call.1} parent=11 // pred_check_branch
          %127 = sbr.rel (%p125) target = $region16
        $region15: #{tpu_custom_call.1} parent=11 // pred_region
          %s129 = ssub.s32 128, 128
          %130 = vsyncadd [#allocation7], %s129
          %s132 = sshll.u32 [#allocation6], 4
          %s133 = int_to_ptr.vmem [resolvable:$true] %s132
          %135 = dma.hbm_to_vmem [thread:$0]  %s1, 128, %s133, [#allocation7]
        $region16: #{tpu_custom_call.1} parent=11 // pred_fallthru
          _
        // Predicated region
        $region17: #{tpu_custom_call.1} parent=11 // pred_check
          %p136 = pneg %p84
        $region18: #{tpu_custom_call.1} parent=11 // pred_check_branch
          %138 = sbr.rel (%p136) target = $region20
        $region19: #{tpu_custom_call.1} parent=11 // pred_region
          %s140 = ssub.s32 3584, 3584
          %141 = vsyncadd [#allocation7], %s140
          %s142 = sshll.u32 [#allocation8], 4
          %s143 = int_to_ptr.vmem [resolvable:$true] %s142
          %148 = dma.hbm_to_vmem [thread:$0]  %s2, 3584, %s143, [#allocation7], 128, 128, 8
        $region20: #{tpu_custom_call.1} parent=11 // pred_fallthru
          _
      $region12: #{tpu_custom_call.1} parent=5 // pred_fallthru
        _
      %p149 = scmp.lt.s32.totalorder %s16, 8
      // Predicated region
      $region21: #{tpu_custom_call.1} parent=5 // pred_check
        %p150 = pneg %p149
      $region22: #{tpu_custom_call.1} parent=5 // pred_check_branch
        %152 = sbr.rel (%p150) target = $region24
      $region23: #{tpu_custom_call.1} parent=5 // pred_region
        // Predicated region
        $region25: #{tpu_custom_call.1} parent=23 // pred_check
          %p153 = pneg %p36
        $region26: #{tpu_custom_call.1} parent=23 // pred_check_branch
          %155 = sbr.rel (%p153) target = $region28
        $region27: #{tpu_custom_call.1} parent=23 // pred_region
          %s156 = sand.u32 %s26, 1
          %s157 = scalar_lea.sflag [#allocation4], %s156
          %s158 = sand.u32 %s26, 1
          %s159 = smul.addr %s158, 8
          %s160 = scalar_lea.vmem [#allocation3], %s159
          %s162 = ssub.s32 128, 128
          %163 = vsyncadd %s157, %s162
          %s164 = smul.addr %s16, 128
          %s165 = scalar_lea.hbm %s0, %s164
          %s167 = sshll.u32 %s160, 4
          %s168 = int_to_ptr.vmem [resolvable:$true] %s167
          %170 = dma.hbm_to_vmem [thread:$0]  %s165, 128, %s168, %s157
        $region28: #{tpu_custom_call.1} parent=23 // pred_fallthru
          _
      $region24: #{tpu_custom_call.1} parent=5 // pred_fallthru
        _
      %p171 = scmp.le.s32.totalorder 1, %s16
      %p172 = scmp.lt.s32.totalorder %s16, 9
      %p173 = pnand %p171, %p172
      %p174 = pneg %p173
      // Predicated region
      $region29: #{tpu_custom_call.1} parent=5 // pred_check
        _
      $region30: #{tpu_custom_call.1} parent=5 // pred_check_branch
        %176 = sbr.rel (%p173) target = $region32
      $region31: #{tpu_custom_call.1} parent=5 // pred_region
        %s177 = ssub.s32 %s16, 1
        %s178 = sand.u32 %s29, 1
        %s179 = scalar_lea.sflag [#allocation4], %s178
        %s180 = sand.u32 %s29, 1
        %s181 = smul.addr %s180, 8
        %s182 = scalar_lea.vmem [#allocation3], %s181
        // Predicated region
        $region33: #{tpu_custom_call.1} parent=31 // pred_check
          %p183 = pneg %p42
        $region34: #{tpu_custom_call.1} parent=31 // pred_check_branch
          %185 = sbr.rel (%p183) target = $region36
        $region35: #{tpu_custom_call.1} parent=31 // pred_region
          %186 = dma.done %s179, 128
        $region36: #{tpu_custom_call.1} parent=31 // pred_fallthru
          _
        // Predicated region
        $region37: #{tpu_custom_call.1} parent=31 // pred_check
          %p187 = pneg %p63
        $region38: #{tpu_custom_call.1} parent=31 // pred_check_branch
          %189 = sbr.rel (%p187) target = $region40
        $region39: #{tpu_custom_call.1} parent=31 // pred_region
          %190 = dma.done [#allocation7], 128
        $region40: #{tpu_custom_call.1} parent=31 // pred_fallthru
          _
        // Predicated region
        $region41: #{tpu_custom_call.1} parent=31 // pred_check
          %p191 = pneg %p84
        $region42: #{tpu_custom_call.1} parent=31 // pred_check_branch
          %193 = sbr.rel (%p191) target = $region44
        $region43: #{tpu_custom_call.1} parent=31 // pred_region
          %194 = dma.done [#allocation7], 3584
        $region44: #{tpu_custom_call.1} parent=31 // pred_fallthru
          _
        %s195 = sand.u32 %s29, 1
        %s196 = scalar_lea.sflag [#allocation4], %s195
        %s197 = sand.u32 %s29, 1
        %s198 = smul.addr %s197, 8
        %s199 = scalar_lea.vmem [#allocation3], %s198
        %p200 = pneg %p42
        %p201 = pneg %p39
        %p202 = pneg %p63
        %p203 = pneg %p60
        %p204 = pneg %p84
        %p205 = pneg %p81
        %p206 = pneg %p110
        %p207 = pneg %p107
        %s208 = sand.u32 %s97, 1
        %s209 = scalar_lea.sflag [#allocation5], %s208
        %s210 = sand.u32 %s97, 1
        %s211 = smul.addr %s210, 8
        %s212 = scalar_lea.vmem [#allocation9], %s211
        %p213 = scmp.eq.s32.totalorder %s21, 0
        // Predicated region
        $region45: #{tpu_custom_call.1} parent=31 // pred_check
          %p214 = pneg %p213
        $region46: #{tpu_custom_call.1} parent=31 // pred_check_branch
          %216 = sbr.rel (%p214) target = $region48
        $region47: #{tpu_custom_call.1} parent=31 // pred_region
          %v217 = vld [vmem:[#allocation6] sm:$0xff]
          %vm218 = vcmask 261120
          %219 = vst.msk [vmem:[#allocation2] sm:$0xff] %vm218, %v217
        $region48: #{tpu_custom_call.1} parent=31 // pred_fallthru
          _
        %v220 = vld [vmem:[%s182] sm:$0xff]
        %v221 = vld [vmem:[#allocation2] sm:$0xff]
        %v222 = vld [vmem:[#allocation8 + $0xd8] sm:$0xff]
        %v223 = vld [vmem:[#allocation8] sm:$0xff]
        %v224 = vld [vmem:[#allocation8 + $0x8] sm:$0xff]
        %v225 = vlaneseq
        %v226 = vshrl.u32 %v225, 7
        %v227 = vsub.s32 0, %v226
        %v228 = vrot.slane %v222, %v227
        %vm229 = vcmask 130048
        %v231 = vsel %vm229, %v220, 0
        %233 = vmatprep.subr.mxu0 0.0
        %234 = vmatpush1.msra.mxu0 %v223
        %235 = vmatprep.subr.mxu0 0.0
        %236 = vmatpush1.msra.mxu0 %v224
        %237 = vmatprep.subr.mxu0 0.0
        %238 = vmatpush1.msra.mxu0 0.0
        %239 = vmatprep.subr.mxu0 0.0
        %240 = vmatpush1.msra.mxu0 0.0
        %241 = vmatprep.subr.mxu0 0.0
        %242 = vmatpush1.msra.mxu0 0.0
        %243 = vmatprep.subr.mxu0 0.0
        %244 = vmatpush1.msra.mxu0 0.0
        %245 = vmatprep.subr.mxu0 0.0
        %246 = vmatpush1.msra.mxu0 0.0
        %247 = vmatprep.subr.mxu0 0.0
        %248 = vmatpush1.msra.mxu0 0.0
        %249 = vmatprep.subr.mxu0 0.0
        %250 = vmatpush1.msra.mxu0 0.0
        %251 = vmatprep.subr.mxu0 0.0
        %252 = vmatpush1.msra.mxu0 0.0
        %253 = vmatprep.subr.mxu0 0.0
        %254 = vmatpush1.msra.mxu0 0.0
        %255 = vmatprep.subr.mxu0 0.0
        %256 = vmatpush1.msra.mxu0 0.0
        %257 = vmatprep.subr.mxu0 0.0
        %258 = vmatpush1.msra.mxu0 0.0
        %259 = vmatprep.subr.mxu0 0.0
        %260 = vmatpush1.msra.mxu0 0.0
        %261 = vmatprep.subr.mxu0 0.0
        %262 = vmatpush1.msra.mxu0 0.0
        %263 = vmatprep.subr.mxu0 0.0
        %264 = vmatpush1.msra.mxu0 0.0
        %265 = vmatprep.subr.mxu0 0.0
        %266 = vmatpush1.msra.mxu0 0.0
        %267 = vmatprep.subr.mxu0 0.0
        %268 = vmatpush1.msra.mxu0 0.0
        %269 = vmatprep.subr.mxu0 0.0
        %270 = vmatpush1.msra.mxu0 0.0
        %271 = vmatprep.subr.mxu0 0.0
        %272 = vmatpush1.msra.mxu0 0.0
        %273 = vmatprep.subr.mxu0 0.0
        %274 = vmatpush1.msra.mxu0 0.0
        %275 = vmatprep.subr.mxu0 0.0
        %276 = vmatpush1.msra.mxu0 0.0
        %277 = vmatprep.subr.mxu0 0.0
        %278 = vmatpush1.msra.mxu0 0.0
        %279 = vmatprep.subr.mxu0 0.0
        %280 = vmatpush1.msra.mxu0 0.0
        %281 = vmatprep.subr.mxu0 0.0
        %282 = vmatpush1.msra.mxu0 0.0
        %283 = vmatprep.subr.mxu0 0.0
        %284 = vmatpush1.msra.mxu0 0.0
        %285 = vmatprep.subr.mxu0 0.0
        %286 = vmatpush1.msra.mxu0 0.0
        %287 = vmatprep.subr.mxu0 0.0
        %288 = vmatpush1.msra.mxu0 0.0
        %289 = vmatprep.subr.mxu0 0.0
        %290 = vmatpush1.msra.mxu0 0.0
        %291 = vmatprep.subr.mxu0 0.0
        %292 = vmatpush1.msra.mxu0 0.0
        %293 = vmatprep.subr.mxu0 0.0
        %294 = vmatpush1.msra.mxu0 0.0
        %295 = vmatprep.subr.mxu0 0.0
        %296 = vmatpush1.msra.mxu0 0.0
        %297 = vmatprep.mubr.f32.mxu0 0.0
        %298 = vmatmul.mubr.f32.gmra.mrb[0].mxu0 %v231
        %v299 = vpop.f32.mrb[0].mxu0
        %v300 = vadd.f32 %v228, %v299
        %v301 = vpop.f32.mrb[0].mxu0
        %302 = vdwg.mxu0
        %v303 = vmax.f32 %v300, 0.0
        %v304 = vld [vmem:[#allocation8 + $0x10] sm:$0xff]
        %v305 = vld [vmem:[#allocation8 + $0x18] sm:$0xff]
        %v306 = vld [vmem:[#allocation8 + $0x20] sm:$0xff]
        %v307 = vld [vmem:[#allocation8 + $0x28] sm:$0xff]
        %v308 = vld [vmem:[#allocation8 + $0x30] sm:$0xff]
        %v309 = vld [vmem:[#allocation8 + $0x38] sm:$0xff]
        %v310 = vld [vmem:[#allocation8 + $0x40] sm:$0xff]
        %v311 = vld [vmem:[#allocation8 + $0x48] sm:$0xff]
        %v312 = vlaneseq
        %v313 = vshrl.u32 %v312, 7
        %v314 = vsub.s32 1, %v313
        %v315 = vrot.slane %v222, %v314
        %vm316 = vcmask 261120
        %v318 = vsel %vm316, %v303, 0
        %320 = vmatprep.subr.mxu0 0.0
        %321 = vmatpush1.msra.mxu0 %v304
        %322 = vmatprep.subr.mxu0 0.0
        %323 = vmatpush1.msra.mxu0 %v305
        %324 = vmatprep.subr.mxu0 0.0
        %325 = vmatpush1.msra.mxu0 %v306
        %326 = vmatprep.subr.mxu0 0.0
        %327 = vmatpush1.msra.mxu0 %v307
        %328 = vmatprep.subr.mxu0 0.0
        %329 = vmatpush1.msra.mxu0 0.0
        %330 = vmatprep.subr.mxu0 0.0
        %331 = vmatpush1.msra.mxu0 0.0
        %332 = vmatprep.subr.mxu0 0.0
        %333 = vmatpush1.msra.mxu0 0.0
        %334 = vmatprep.subr.mxu0 0.0
        %335 = vmatpush1.msra.mxu0 0.0
        %336 = vmatprep.subr.mxu0 0.0
        %337 = vmatpush1.msra.mxu0 0.0
        %338 = vmatprep.subr.mxu0 0.0
        %339 = vmatpush1.msra.mxu0 0.0
        %340 = vmatprep.subr.mxu0 0.0
        %341 = vmatpush1.msra.mxu0 0.0
        %342 = vmatprep.subr.mxu0 0.0
        %343 = vmatpush1.msra.mxu0 0.0
        %344 = vmatprep.subr.mxu0 0.0
        %345 = vmatpush1.msra.mxu0 0.0
        %346 = vmatprep.subr.mxu0 0.0
        %347 = vmatpush1.msra.mxu0 0.0
        %348 = vmatprep.subr.mxu0 0.0
        %349 = vmatpush1.msra.mxu0 0.0
        %350 = vmatprep.subr.mxu0 0.0
        %351 = vmatpush1.msra.mxu0 0.0
        %352 = vmatprep.subr.mxu0 0.0
        %353 = vmatpush1.msra.mxu0 0.0
        %354 = vmatprep.subr.mxu0 0.0
        %355 = vmatpush1.msra.mxu0 0.0
        %356 = vmatprep.subr.mxu0 0.0
        %357 = vmatpush1.msra.mxu0 0.0
        %358 = vmatprep.subr.mxu0 0.0
        %359 = vmatpush1.msra.mxu0 0.0
        %360 = vmatprep.subr.mxu0 0.0
        %361 = vmatpush1.msra.mxu0 0.0
        %362 = vmatprep.subr.mxu0 0.0
        %363 = vmatpush1.msra.mxu0 0.0
        %364 = vmatprep.subr.mxu0 0.0
        %365 = vmatpush1.msra.mxu0 0.0
        %366 = vmatprep.subr.mxu0 0.0
        %367 = vmatpush1.msra.mxu0 0.0
        %368 = vmatprep.subr.mxu0 0.0
        %369 = vmatpush1.msra.mxu0 0.0
        %370 = vmatprep.subr.mxu0 0.0
        %371 = vmatpush1.msra.mxu0 0.0
        %372 = vmatprep.subr.mxu0 0.0
        %373 = vmatpush1.msra.mxu0 0.0
        %374 = vmatprep.subr.mxu0 0.0
        %375 = vmatpush1.msra.mxu0 0.0
        %376 = vmatprep.subr.mxu0 0.0
        %377 = vmatpush1.msra.mxu0 0.0
        %378 = vmatprep.subr.mxu0 0.0
        %379 = vmatpush1.msra.mxu0 0.0
        %380 = vmatprep.subr.mxu0 0.0
        %381 = vmatpush1.msra.mxu0 0.0
        %382 = vmatprep.subr.mxu0 0.0
        %383 = vmatpush1.msra.mxu0 0.0
        %384 = vmatprep.mubr.f32.mxu0 0.0
        %385 = vmatmul.mubr.f32.gmra.mrb[0].mxu0 %v318
        %v386 = vpop.f32.mrb[0].mxu0
        %v387 = vadd.f32 %v315, %v386
        %v388 = vpop.f32.mrb[0].mxu0
        %389 = vdwg.mxu0
        %v390 = vlaneseq
        %v391 = vshrl.u32 %v390, 7
        %v392 = vsub.s32 2, %v391
        %v393 = vrot.slane %v222, %v392
        %v395 = vsel %vm316, %v221, 0
        %397 = vmatprep.subr.mxu0 0.0
        %398 = vmatpush1.msra.mxu0 %v308
        %399 = vmatprep.subr.mxu0 0.0
        %400 = vmatpush1.msra.mxu0 %v309
        %401 = vmatprep.subr.mxu0 0.0
        %402 = vmatpush1.msra.mxu0 %v310
        %403 = vmatprep.subr.mxu0 0.0
        %404 = vmatpush1.msra.mxu0 %v311
        %405 = vmatprep.subr.mxu0 0.0
        %406 = vmatpush1.msra.mxu0 0.0
        %407 = vmatprep.subr.mxu0 0.0
        %408 = vmatpush1.msra.mxu0 0.0
        %409 = vmatprep.subr.mxu0 0.0
        %410 = vmatpush1.msra.mxu0 0.0
        %411 = vmatprep.subr.mxu0 0.0
        %412 = vmatpush1.msra.mxu0 0.0
        %413 = vmatprep.subr.mxu0 0.0
        %414 = vmatpush1.msra.mxu0 0.0
        %415 = vmatprep.subr.mxu0 0.0
        %416 = vmatpush1.msra.mxu0 0.0
        %417 = vmatprep.subr.mxu0 0.0
        %418 = vmatpush1.msra.mxu0 0.0
        %419 = vmatprep.subr.mxu0 0.0
        %420 = vmatpush1.msra.mxu0 0.0
        %421 = vmatprep.subr.mxu0 0.0
        %422 = vmatpush1.msra.mxu0 0.0
        %423 = vmatprep.subr.mxu0 0.0
        %424 = vmatpush1.msra.mxu0 0.0
        %425 = vmatprep.subr.mxu0 0.0
        %426 = vmatpush1.msra.mxu0 0.0
        %427 = vmatprep.subr.mxu0 0.0
        %428 = vmatpush1.msra.mxu0 0.0
        %429 = vmatprep.subr.mxu0 0.0
        %430 = vmatpush1.msra.mxu0 0.0
        %431 = vmatprep.subr.mxu0 0.0
        %432 = vmatpush1.msra.mxu0 0.0
        %433 = vmatprep.subr.mxu0 0.0
        %434 = vmatpush1.msra.mxu0 0.0
        %435 = vmatprep.subr.mxu0 0.0
        %436 = vmatpush1.msra.mxu0 0.0
        %437 = vmatprep.subr.mxu0 0.0
        %438 = vmatpush1.msra.mxu0 0.0
        %439 = vmatprep.subr.mxu0 0.0
        %440 = vmatpush1.msra.mxu0 0.0
        %441 = vmatprep.subr.mxu0 0.0
        %442 = vmatpush1.msra.mxu0 0.0
        %443 = vmatprep.subr.mxu0 0.0
        %444 = vmatpush1.msra.mxu0 0.0
        %445 = vmatprep.subr.mxu0 0.0
        %446 = vmatpush1.msra.mxu0 0.0
        %447 = vmatprep.subr.mxu0 0.0
        %448 = vmatpush1.msra.mxu0 0.0
        %449 = vmatprep.subr.mxu0 0.0
        %450 = vmatpush1.msra.mxu0 0.0
        %451 = vmatprep.subr.mxu0 0.0
        %452 = vmatpush1.msra.mxu0 0.0
        %453 = vmatprep.subr.mxu0 0.0
        %454 = vmatpush1.msra.mxu0 0.0
        %455 = vmatprep.subr.mxu0 0.0
        %456 = vmatpush1.msra.mxu0 0.0
        %457 = vmatprep.subr.mxu0 0.0
        %458 = vmatpush1.msra.mxu0 0.0
        %459 = vmatprep.subr.mxu0 0.0
        %460 = vmatpush1.msra.mxu0 0.0
        %461 = vmatprep.mubr.f32.mxu0 0.0
        %462 = vmatmul.mubr.f32.gmra.mrb[0].mxu0 %v395
        %v463 = vpop.f32.mrb[0].mxu0
        %v464 = vadd.f32 %v393, %v463
        %v465 = vpop.f32.mrb[0].mxu0
        %466 = vdwg.mxu0
        %v467 = vadd.f32 %v387, %v464
        %v468 = vxor.u32 %v467, 2147483648
        %v469 = vmul.f32 %v468, 1.442695
        %v470 = vpow.pop %v469
        %v471 = vadd.f32 %v470, 1.0
        %v472 = vrcp.pop %v471
        %v473 = vmul.f32 1.0, %v472
        %475 = vrot.lane.b32.xlu0 %v464, 64
        %v476 = vpop.permute.xlu0 %475
        %v478 = vmul.f32 %v473, %v476
        %480 = vrot.lane.b32.xlu0 %v478, 64
        %v481 = vpop.permute.xlu0 %480
        %v483 = vadd.f32 %v387, %v481
        %v484 = vtanh.pop %v483
        %v485 = vsub.f32 1.0, %v473
        %487 = vrot.lane.b32.xlu0 %v484, 96
        %v488 = vpop.permute.xlu0 %487
        %v490 = vmul.f32 %v485, %v488
        %491 = vrot.lane.b32.xlu0 %v221, 32
        %v492 = vpop.permute.xlu0 %491
        %v494 = vmul.f32 %v473, %v492
        %v495 = vadd.f32 %v490, %v494
        %497 = vrot.lane.b32.xlu0 %v495, 96
        %v498 = vpop.permute.xlu0 %497
        %500 = vst.msk [vmem:[#allocation2] sm:$0xff] %vm316, %v498
        %v501 = vld [vmem:[#allocation8 + $0x50] sm:$0xff]
        %v502 = vld [vmem:[#allocation8 + $0x58] sm:$0xff]
        %v503 = vld [vmem:[#allocation8 + $0x60] sm:$0xff]
        %v504 = vld [vmem:[#allocation8 + $0x68] sm:$0xff]
        %v505 = vlaneseq
        %v506 = vshrl.u32 %v505, 7
        %v507 = vsub.s32 3, %v506
        %v508 = vrot.slane %v222, %v507
        %v509 = vsel %vm316, %v498, 0
        %511 = vmatprep.subr.mxu0 0.0
        %512 = vmatpush1.msra.mxu0 %v501
        %513 = vmatprep.subr.mxu0 0.0
        %514 = vmatpush1.msra.mxu0 %v502
        %515 = vmatprep.subr.mxu0 0.0
        %516 = vmatpush1.msra.mxu0 %v503
        %517 = vmatprep.subr.mxu0 0.0
        %518 = vmatpush1.msra.mxu0 %v504
        %519 = vmatprep.subr.mxu0 0.0
        %520 = vmatpush1.msra.mxu0 0.0
        %521 = vmatprep.subr.mxu0 0.0
        %522 = vmatpush1.msra.mxu0 0.0
        %523 = vmatprep.subr.mxu0 0.0
        %524 = vmatpush1.msra.mxu0 0.0
        %525 = vmatprep.subr.mxu0 0.0
        %526 = vmatpush1.msra.mxu0 0.0
        %527 = vmatprep.subr.mxu0 0.0
        %528 = vmatpush1.msra.mxu0 0.0
        %529 = vmatprep.subr.mxu0 0.0
        %530 = vmatpush1.msra.mxu0 0.0
        %531 = vmatprep.subr.mxu0 0.0
        %532 = vmatpush1.msra.mxu0 0.0
        %533 = vmatprep.subr.mxu0 0.0
        %534 = vmatpush1.msra.mxu0 0.0
        %535 = vmatprep.subr.mxu0 0.0
        %536 = vmatpush1.msra.mxu0 0.0
        %537 = vmatprep.subr.mxu0 0.0
        %538 = vmatpush1.msra.mxu0 0.0
        %539 = vmatprep.subr.mxu0 0.0
        %540 = vmatpush1.msra.mxu0 0.0
        %541 = vmatprep.subr.mxu0 0.0
        %542 = vmatpush1.msra.mxu0 0.0
        %543 = vmatprep.subr.mxu0 0.0
        %544 = vmatpush1.msra.mxu0 0.0
        %545 = vmatprep.subr.mxu0 0.0
        %546 = vmatpush1.msra.mxu0 0.0
        %547 = vmatprep.subr.mxu0 0.0
        %548 = vmatpush1.msra.mxu0 0.0
        %549 = vmatprep.subr.mxu0 0.0
        %550 = vmatpush1.msra.mxu0 0.0
        %551 = vmatprep.subr.mxu0 0.0
        %552 = vmatpush1.msra.mxu0 0.0
        %553 = vmatprep.subr.mxu0 0.0
        %554 = vmatpush1.msra.mxu0 0.0
        %555 = vmatprep.subr.mxu0 0.0
        %556 = vmatpush1.msra.mxu0 0.0
        %557 = vmatprep.subr.mxu0 0.0
        %558 = vmatpush1.msra.mxu0 0.0
        %559 = vmatprep.subr.mxu0 0.0
        %560 = vmatpush1.msra.mxu0 0.0
        %561 = vmatprep.subr.mxu0 0.0
        %562 = vmatpush1.msra.mxu0 0.0
        %563 = vmatprep.subr.mxu0 0.0
        %564 = vmatpush1.msra.mxu0 0.0
        %565 = vmatprep.subr.mxu0 0.0
        %566 = vmatpush1.msra.mxu0 0.0
        %567 = vmatprep.subr.mxu0 0.0
        %568 = vmatpush1.msra.mxu0 0.0
        %569 = vmatprep.subr.mxu0 0.0
        %570 = vmatpush1.msra.mxu0 0.0
        %571 = vmatprep.subr.mxu0 0.0
        %572 = vmatpush1.msra.mxu0 0.0
        %573 = vmatprep.subr.mxu0 0.0
        %574 = vmatpush1.msra.mxu0 0.0
        %575 = vmatprep.mubr.f32.mxu0 0.0
        %576 = vmatmul.mubr.f32.gmra.mrb[0].mxu0 %v509
        %v577 = vpop.f32.mrb[0].mxu0
        %v578 = vadd.f32 %v508, %v577
        %v579 = vpop.f32.mrb[0].mxu0
        %580 = vdwg.mxu0
        %v581 = vmax.f32 %v578, 0.0
        %v582 = vld [vmem:[#allocation8 + $0x70] sm:$0xff]
        %v583 = vld [vmem:[#allocation8 + $0x78] sm:$0xff]
        %v584 = vld [vmem:[#allocation8 + $0x80] sm:$0xff]
        %v585 = vld [vmem:[#allocation8 + $0x88] sm:$0xff]
        %v586 = vlaneseq
        %v587 = vshrl.u32 %v586, 7
        %v588 = vsub.s32 4, %v587
        %v589 = vrot.slane %v222, %v588
        %v591 = vsel %vm316, %v581, 0
        %593 = vmatprep.subr.mxu0 0.0
        %594 = vmatpush1.msra.mxu0 %v582
        %595 = vmatprep.subr.mxu0 0.0
        %596 = vmatpush1.msra.mxu0 %v583
        %597 = vmatprep.subr.mxu0 0.0
        %598 = vmatpush1.msra.mxu0 %v584
        %599 = vmatprep.subr.mxu0 0.0
        %600 = vmatpush1.msra.mxu0 %v585
        %601 = vmatprep.subr.mxu0 0.0
        %602 = vmatpush1.msra.mxu0 0.0
        %603 = vmatprep.subr.mxu0 0.0
        %604 = vmatpush1.msra.mxu0 0.0
        %605 = vmatprep.subr.mxu0 0.0
        %606 = vmatpush1.msra.mxu0 0.0
        %607 = vmatprep.subr.mxu0 0.0
        %608 = vmatpush1.msra.mxu0 0.0
        %609 = vmatprep.subr.mxu0 0.0
        %610 = vmatpush1.msra.mxu0 0.0
        %611 = vmatprep.subr.mxu0 0.0
        %612 = vmatpush1.msra.mxu0 0.0
        %613 = vmatprep.subr.mxu0 0.0
        %614 = vmatpush1.msra.mxu0 0.0
        %615 = vmatprep.subr.mxu0 0.0
        %616 = vmatpush1.msra.mxu0 0.0
        %617 = vmatprep.subr.mxu0 0.0
        %618 = vmatpush1.msra.mxu0 0.0
        %619 = vmatprep.subr.mxu0 0.0
        %620 = vmatpush1.msra.mxu0 0.0
        %621 = vmatprep.subr.mxu0 0.0
        %622 = vmatpush1.msra.mxu0 0.0
        %623 = vmatprep.subr.mxu0 0.0
        %624 = vmatpush1.msra.mxu0 0.0
        %625 = vmatprep.subr.mxu0 0.0
        %626 = vmatpush1.msra.mxu0 0.0
        %627 = vmatprep.subr.mxu0 0.0
        %628 = vmatpush1.msra.mxu0 0.0
        %629 = vmatprep.subr.mxu0 0.0
        %630 = vmatpush1.msra.mxu0 0.0
        %631 = vmatprep.subr.mxu0 0.0
        %632 = vmatpush1.msra.mxu0 0.0
        %633 = vmatprep.subr.mxu0 0.0
        %634 = vmatpush1.msra.mxu0 0.0
        %635 = vmatprep.subr.mxu0 0.0
        %636 = vmatpush1.msra.mxu0 0.0
        %637 = vmatprep.subr.mxu0 0.0
        %638 = vmatpush1.msra.mxu0 0.0
        %639 = vmatprep.subr.mxu0 0.0
        %640 = vmatpush1.msra.mxu0 0.0
        %641 = vmatprep.subr.mxu0 0.0
        %642 = vmatpush1.msra.mxu0 0.0
        %643 = vmatprep.subr.mxu0 0.0
        %644 = vmatpush1.msra.mxu0 0.0
        %645 = vmatprep.subr.mxu0 0.0
        %646 = vmatpush1.msra.mxu0 0.0
        %647 = vmatprep.subr.mxu0 0.0
        %648 = vmatpush1.msra.mxu0 0.0
        %649 = vmatprep.subr.mxu0 0.0
        %650 = vmatpush1.msra.mxu0 0.0
        %651 = vmatprep.subr.mxu0 0.0
        %652 = vmatpush1.msra.mxu0 0.0
        %653 = vmatprep.subr.mxu0 0.0
        %654 = vmatpush1.msra.mxu0 0.0
        %655 = vmatprep.subr.mxu0 0.0
        %656 = vmatpush1.msra.mxu0 0.0
        %657 = vmatprep.mubr.f32.mxu0 0.0
        %658 = vmatmul.mubr.f32.gmra.mrb[0].mxu0 %v591
        %v659 = vpop.f32.mrb[0].mxu0
        %v660 = vadd.f32 %v589, %v659
        %v661 = vpop.f32.mrb[0].mxu0
        %662 = vdwg.mxu0
        %v663 = vmul.f32 %v660, 1.442695
        %v664 = vpow.pop %v663
        %v665 = vmax.f32 %v664, 0.002
        %v666 = vrsqrt.pop %v665
        %v667 = vmul.f32 %v665, %v666
        %vm668 = vcmp.eq.f32.partialorder %v665, inf
        %v669 = vsel %vm668, %v665, %v667
        %vm670 = vcmp.eq.f32.partialorder %v665, 0.0
        %v671 = vand.u32 %v665, 2147483648
        %v672 = vsel %vm670, %v671, %v669
        %673 = vrot.lane.b32.xlu0 %v220, 120
        %v674 = vpop.permute.xlu0 %673
        %v676 = vmul.f32 %v672, %v674
        %678 = vrot.lane.b32.xlu0 %v676, 120
        %v679 = vpop.permute.xlu0 %678
        %v681 = vadd.f32 %v660, %v679
        %v682 = vld [vmem:[#allocation8 + $0x90] sm:$0xff]
        %v683 = vlaneseq
        %v684 = vshrl.u32 %v683, 7
        %v685 = vsub.s32 5, %v684
        %v686 = vrot.slane %v222, %v685
        %vm687 = vcmask 64512
        %v689 = vsel %vm687, %v681, 0
        %691 = vmatprep.subr.mxu0 0.0
        %692 = vmatpush1.msra.mxu0 %v682
        %693 = vmatprep.subr.mxu0 0.0
        %694 = vmatpush1.msra.mxu0 0.0
        %695 = vmatprep.subr.mxu0 0.0
        %696 = vmatpush1.msra.mxu0 0.0
        %697 = vmatprep.subr.mxu0 0.0
        %698 = vmatpush1.msra.mxu0 0.0
        %699 = vmatprep.subr.mxu0 0.0
        %700 = vmatpush1.msra.mxu0 0.0
        %701 = vmatprep.subr.mxu0 0.0
        %702 = vmatpush1.msra.mxu0 0.0
        %703 = vmatprep.subr.mxu0 0.0
        %704 = vmatpush1.msra.mxu0 0.0
        %705 = vmatprep.subr.mxu0 0.0
        %706 = vmatpush1.msra.mxu0 0.0
        %707 = vmatprep.subr.mxu0 0.0
        %708 = vmatpush1.msra.mxu0 0.0
        %709 = vmatprep.subr.mxu0 0.0
        %710 = vmatpush1.msra.mxu0 0.0
        %711 = vmatprep.subr.mxu0 0.0
        %712 = vmatpush1.msra.mxu0 0.0
        %713 = vmatprep.subr.mxu0 0.0
        %714 = vmatpush1.msra.mxu0 0.0
        %715 = vmatprep.subr.mxu0 0.0
        %716 = vmatpush1.msra.mxu0 0.0
        %717 = vmatprep.subr.mxu0 0.0
        %718 = vmatpush1.msra.mxu0 0.0
        %719 = vmatprep.subr.mxu0 0.0
        %720 = vmatpush1.msra.mxu0 0.0
        %721 = vmatprep.subr.mxu0 0.0
        %722 = vmatpush1.msra.mxu0 0.0
        %723 = vmatprep.subr.mxu0 0.0
        %724 = vmatpush1.msra.mxu0 0.0
        %725 = vmatprep.subr.mxu0 0.0
        %726 = vmatpush1.msra.mxu0 0.0
        %727 = vmatprep.subr.mxu0 0.0
        %728 = vmatpush1.msra.mxu0 0.0
        %729 = vmatprep.subr.mxu0 0.0
        %730 = vmatpush1.msra.mxu0 0.0
        %731 = vmatprep.subr.mxu0 0.0
        %732 = vmatpush1.msra.mxu0 0.0
        %733 = vmatprep.subr.mxu0 0.0
        %734 = vmatpush1.msra.mxu0 0.0
        %735 = vmatprep.subr.mxu0 0.0
        %736 = vmatpush1.msra.mxu0 0.0
        %737 = vmatprep.subr.mxu0 0.0
        %738 = vmatpush1.msra.mxu0 0.0
        %739 = vmatprep.subr.mxu0 0.0
        %740 = vmatpush1.msra.mxu0 0.0
        %741 = vmatprep.subr.mxu0 0.0
        %742 = vmatpush1.msra.mxu0 0.0
        %743 = vmatprep.subr.mxu0 0.0
        %744 = vmatpush1.msra.mxu0 0.0
        %745 = vmatprep.subr.mxu0 0.0
        %746 = vmatpush1.msra.mxu0 0.0
        %747 = vmatprep.subr.mxu0 0.0
        %748 = vmatpush1.msra.mxu0 0.0
        %749 = vmatprep.subr.mxu0 0.0
        %750 = vmatpush1.msra.mxu0 0.0
        %751 = vmatprep.subr.mxu0 0.0
        %752 = vmatpush1.msra.mxu0 0.0
        %753 = vmatprep.subr.mxu0 0.0
        %754 = vmatpush1.msra.mxu0 0.0
        %755 = vmatprep.mubr.f32.mxu0 0.0
        %756 = vmatmul.mubr.f32.gmra.mrb[0].mxu0 %v689
        %v757 = vpop.f32.mrb[0].mxu0
        %v758 = vadd.f32 %v686, %v757
        %v759 = vpop.f32.mrb[0].mxu0
        %760 = vdwg.mxu0
        %v761 = vmax.f32 %v758, 0.0
        %v762 = vld [vmem:[#allocation8 + $0x98] sm:$0xff]
        %v763 = vld [vmem:[#allocation8 + $0xa0] sm:$0xff]
        %v764 = vld [vmem:[#allocation8 + $0xa8] sm:$0xff]
        %v765 = vld [vmem:[#allocation8 + $0xb0] sm:$0xff]
        %v766 = vld [vmem:[#allocation8 + $0xb8] sm:$0xff]
        %v767 = vld [vmem:[#allocation8 + $0xc0] sm:$0xff]
        %v768 = vld [vmem:[#allocation8 + $0xc8] sm:$0xff]
        %v769 = vld [vmem:[#allocation8 + $0xd0] sm:$0xff]
        %771 = vrot.lane.b32.xlu0 %v761, 32
        %v772 = vpop.permute.xlu0 %771
        %v774 = vsel %vm316, %v498, %v772
        %v775 = vlaneseq
        %v776 = vshrl.u32 %v775, 7
        %v777 = vsub.s32 6, %v776
        %v778 = vrot.slane %v222, %v777
        %vm779 = vcmask 523264
        %v781 = vsel %vm779, %v774, 0
        %783 = vmatprep.subr.mxu0 0.0
        %784 = vmatpush1.msra.mxu0 %v762
        %785 = vmatprep.subr.mxu0 0.0
        %786 = vmatpush1.msra.mxu0 %v763
        %787 = vmatprep.subr.mxu0 0.0
        %788 = vmatpush1.msra.mxu0 %v764
        %789 = vmatprep.subr.mxu0 0.0
        %790 = vmatpush1.msra.mxu0 %v765
        %791 = vmatprep.subr.mxu0 0.0
        %792 = vmatpush1.msra.mxu0 %v766
        %793 = vmatprep.subr.mxu0 0.0
        %794 = vmatpush1.msra.mxu0 %v767
        %795 = vmatprep.subr.mxu0 0.0
        %796 = vmatpush1.msra.mxu0 %v768
        %797 = vmatprep.subr.mxu0 0.0
        %798 = vmatpush1.msra.mxu0 %v769
        %799 = vmatprep.subr.mxu0 0.0
        %800 = vmatpush1.msra.mxu0 0.0
        %801 = vmatprep.subr.mxu0 0.0
        %802 = vmatpush1.msra.mxu0 0.0
        %803 = vmatprep.subr.mxu0 0.0
        %804 = vmatpush1.msra.mxu0 0.0
        %805 = vmatprep.subr.mxu0 0.0
        %806 = vmatpush1.msra.mxu0 0.0
        %807 = vmatprep.subr.mxu0 0.0
        %808 = vmatpush1.msra.mxu0 0.0
        %809 = vmatprep.subr.mxu0 0.0
        %810 = vmatpush1.msra.mxu0 0.0
        %811 = vmatprep.subr.mxu0 0.0
        %812 = vmatpush1.msra.mxu0 0.0
        %813 = vmatprep.subr.mxu0 0.0
        %814 = vmatpush1.msra.mxu0 0.0
        %815 = vmatprep.subr.mxu0 0.0
        %816 = vmatpush1.msra.mxu0 0.0
        %817 = vmatprep.subr.mxu0 0.0
        %818 = vmatpush1.msra.mxu0 0.0
        %819 = vmatprep.subr.mxu0 0.0
        %820 = vmatpush1.msra.mxu0 0.0
        %821 = vmatprep.subr.mxu0 0.0
        %822 = vmatpush1.msra.mxu0 0.0
        %823 = vmatprep.subr.mxu0 0.0
        %824 = vmatpush1.msra.mxu0 0.0
        %825 = vmatprep.subr.mxu0 0.0
        %826 = vmatpush1.msra.mxu0 0.0
        %827 = vmatprep.subr.mxu0 0.0
        %828 = vmatpush1.msra.mxu0 0.0
        %829 = vmatprep.subr.mxu0 0.0
        %830 = vmatpush1.msra.mxu0 0.0
        %831 = vmatprep.subr.mxu0 0.0
        %832 = vmatpush1.msra.mxu0 0.0
        %833 = vmatprep.subr.mxu0 0.0
        %834 = vmatpush1.msra.mxu0 0.0
        %835 = vmatprep.subr.mxu0 0.0
        %836 = vmatpush1.msra.mxu0 0.0
        %837 = vmatprep.subr.mxu0 0.0
        %838 = vmatpush1.msra.mxu0 0.0
        %839 = vmatprep.subr.mxu0 0.0
        %840 = vmatpush1.msra.mxu0 0.0
        %841 = vmatprep.subr.mxu0 0.0
        %842 = vmatpush1.msra.mxu0 0.0
        %843 = vmatprep.subr.mxu0 0.0
        %844 = vmatpush1.msra.mxu0 0.0
        %845 = vmatprep.subr.mxu0 0.0
        %846 = vmatpush1.msra.mxu0 0.0
        %847 = vmatprep.mubr.f32.mxu0 0.0
        %848 = vmatmul.mubr.f32.gmra.mrb[0].mxu0 %v781
        %v849 = vpop.f32.mrb[0].mxu0
        %v850 = vadd.f32 %v778, %v849
        %v851 = vpop.f32.mrb[0].mxu0
        %852 = vdwg.mxu0
        %854 = vrot.lane.b32.xlu0 %v660, 32
        %v855 = vpop.permute.xlu0 %854
        %858 = vrot.lane.b32.xlu0 %v665, 32
        %v859 = vpop.permute.xlu0 %858
        %861 = vrot.lane.b32.xlu0 %v681, 48
        %v862 = vpop.permute.xlu0 %861
        %865 = vrot.lane.b32.xlu0 %v850, 56
        %v866 = vpop.permute.xlu0 %865
        %v868 = vsel %vm316, %v498, %v855
        %vm869 = vcmask 326656
        %v870 = vsel %vm869, %v868, %v859
        %vm871 = vcmask 392192
        %v872 = vsel %vm871, %v870, %v862
        %vm873 = vcmask 457728
        %v874 = vsel %vm873, %v872, %v866
        %vm875 = vcmask 506880
        %v876 = vsel %vm875, %v874, 0.0
        %877 = vst [vmem:[%s212] sm:$0xff] %v876
        %s878 = sand.u32 %s97, 1
        %s879 = scalar_lea.sflag [#allocation5], %s878
        %s880 = sand.u32 %s97, 1
        %s881 = smul.addr %s880, 8
        %s882 = scalar_lea.vmem [#allocation9], %s881
        // Predicated region
        $region49: #{tpu_custom_call.1} parent=31 // pred_check
          %p883 = pneg %p107
        $region50: #{tpu_custom_call.1} parent=31 // pred_check_branch
          %885 = sbr.rel (%p883) target = $region52
        $region51: #{tpu_custom_call.1} parent=31 // pred_region
          %s887 = ssub.s32 128, 128
          %888 = vsyncadd %s879, %s887
          %s889 = smul.addr %s21, 128
          %s890 = scalar_lea.hbm %s3, %s889
          %s892 = sshll.u32 %s882, 4
          %s893 = int_to_ptr.vmem [resolvable:$true] %s892
          %895 = dma.vmem_to_hbm [thread:$0]  %s893, 128, %s890, %s879
        $region52: #{tpu_custom_call.1} parent=31 // pred_fallthru
          _
      $region32: #{tpu_custom_call.1} parent=5 // pred_fallthru
        _
      %p896 = scmp.le.s32.totalorder 2, %s16
      // Predicated region
      $region53: #{tpu_custom_call.1} parent=5 // pred_check
        %p897 = pneg %p896
      $region54: #{tpu_custom_call.1} parent=5 // pred_check_branch
        %899 = sbr.rel (%p897) target = $region56
      $region55: #{tpu_custom_call.1} parent=5 // pred_region
        %s900 = ssub.s32 %s16, 2
        // Predicated region
        $region57: #{tpu_custom_call.1} parent=55 // pred_check
          %p901 = pneg %p113
        $region58: #{tpu_custom_call.1} parent=55 // pred_check_branch
          %903 = sbr.rel (%p901) target = $region60
        $region59: #{tpu_custom_call.1} parent=55 // pred_region
          %s904 = sand.u32 %s98, 1
          %s905 = scalar_lea.sflag [#allocation5], %s904
          %s906 = sand.u32 %s98, 1
          %s907 = smul.addr %s906, 8
          %s908 = scalar_lea.vmem [#allocation9], %s907
          %909 = dma.done %s905, 128
        $region60: #{tpu_custom_call.1} parent=55 // pred_fallthru
          _
      $region56: #{tpu_custom_call.1} parent=5 // pred_fallthru
        _
    $region6: #{tpu_custom_call.1} parent=1 // loop_footer
      %s20 = sadd.s32 1, %s16
    $region7: #{tpu_custom_call.1} parent=1 // loop_footer_branch
      %15 = sbr.rel target = $region3
    $region8: #{tpu_custom_call.1} parent=1 // loop_exit
      _
    %910 = vsyncpa [#allocation4], 1
    %s911 = scalar_lea.sflag [#allocation4], 1
    %912 = vsyncpa %s911, 1
    %913 = vsyncpa [#allocation7], 1
    %914 = vsyncpa [#allocation5], 1
    %s915 = scalar_lea.sflag [#allocation5], 1
    %916 = vsyncpa %s915, 1

</llo_original>
